<compile_context>
chip_gen: v5e
topology: v5e:2x2
jax: 0.10.0
libtpu: 0.0.40
codegen_flags: <defaults>
</compile_context>

<pallas_src>
import jax
import jax.numpy as jnp
from jax.experimental import pallas as pl
from jax.experimental.pallas import tpu as pltpu

_LANES = 128
_ACC_ROWS = 512          # fixed accumulator height: 512 x 128 f32 = 256 KiB


def _num_tensorcores() -> int:
    """TensorCores addressable by one pallas_call via a 'parallel' grid axis."""
    try:
        dev = jax.devices()[0]
        if dev.platform != "tpu":
            return 1
        kind = dev.device_kind.lower()
    except Exception:
        return 1
    # Single-TC-per-device generations first ("v5 lite" also contains "v5").
    if any(s in kind for s in ("lite", "v5e", "v6e", "v6", "v2", "v3")):
        return 1
    if any(s in kind for s in ("v4", "v5p", "v5", "7x", "v7")):
        return 2
    return 1


def _max_row_tile(itemsize: int) -> int:
    """Rows per streaming step: ~4 MiB/input/step (v6e/v7x), ~2 MiB (v5e)."""
    try:
        kind = jax.devices()[0].device_kind.lower()
    except Exception:
        kind = ""
    is_v5e = ("v5e" in kind) or ("v5 lite" in kind) or ("v5lite" in kind)
    budget = (2 << 20) if is_v5e else (4 << 20)
    rows = budget // (_LANES * max(itemsize, 1))
    return max(_ACC_ROWS, (rows // _ACC_ROWS) * _ACC_ROWS)


def _make_kl_kernel(rows: int, steps: int, row_tile: int, acc_rows: int,
                    needs_mask: bool):
    folds = row_tile // acc_rows

    def kernel(mu_ref, lv_ref, out_ref, acc_ref):
        step = pl.program_id(1)

        @pl.when(step == 0)
        def _init():
            acc_ref[...] = jnp.zeros_like(acc_ref)

        # Streaming step: upcast in-kernel (HBM traffic stays at the input
        # dtype) and accumulate with pure vector adds.
        mu = mu_ref[...].astype(jnp.float32)
        lv = lv_ref[...].astype(jnp.float32)
        term = 1.0 + lv - mu * mu - jnp.exp(lv)

        if needs_mask:
            # Mask rows past the end of the (rows, 128) slab (garbage from the
            # clipped boundary DMA).  Mask the whole expression, not terms.
            base = (pl.program_id(0) * steps + step) * row_tile
            rid = base + jax.lax.broadcasted_iota(jnp.int32,
                                                  (row_tile, _LANES), 0)
            term = jnp.where(rid < rows, term, 0.0)

        if folds == 1:
            contrib = term
        else:
            contrib = term[0:acc_rows]
            for f in range(1, folds):
                contrib = contrib + term[f * acc_rows:(f + 1) * acc_rows]
        acc_ref[...] += contrib

        @pl.when(step == steps - 1)
        def _finalize():
            acc = acc_ref[...]
            if acc_rows >= 8 and acc_rows % 8 == 0:
                # Fold the accumulator down to one (8, 128) block with vector
                # adds; the final tiny reduce happens in the wrapper.
                res = acc[0:8]
                for f in range(1, acc_rows // 8):
                    res = res + acc[f * 8:(f + 1) * 8]
                out_ref[...] = (-0.5 * res)[None]
            else:
                out_ref[...] = jnp.zeros_like(out_ref)
                out_ref[0, 0, 0] = -0.5 * jnp.sum(acc)

    return kernel


def kl_loss(mu: jax.Array, logvar: jax.Array) -> jax.Array:
    """Pallas TPU implementation of KLLoss.forward. Returns an f32 scalar."""
    assert mu.shape == logvar.shape
    total = mu.size
    if total == 0:
        return jnp.zeros((), jnp.float32)

    itemsize = jnp.dtype(mu.dtype).itemsize
    lane_pad = (-total) % _LANES
    rows = (total + lane_pad) // _LANES

    def _prep(x):
        # ravel/reshape of a contiguous array is layout-only; no dtype cast
        # here (upcast happens in-kernel).  The tiny lane pad (only when
        # total % 128 != 0) contributes exactly 0: 1 + 0 - 0 - exp(0) = 0.
        x = jnp.ravel(x)
        if lane_pad:
            x = jnp.pad(x, (0, lane_pad))
        return x.reshape(rows, _LANES)

    mu2, lv2 = _prep(mu), _prep(logvar)

    num_cores = _num_tensorcores()
    max_tile = _max_row_tile(itemsize)

    if rows <= _ACC_ROWS:
        # Tiny input: single core, single step; block == whole slab (legal
        # even when `rows` is not 8-aligned because it equals the array dim).
        num_cores, steps, row_tile, acc_rows = 1, 1, rows, rows
    else:
        acc_rows = _ACC_ROWS  # multiple of 8/16/32 -> dtype-agnostic packing

        def plan(nc):
            rows_pc = pl.cdiv(rows, nc)
            s = pl.cdiv(rows_pc, max_tile)
            rt = pl.cdiv(rows_pc, s * acc_rows) * acc_rows
            return s, rt

        steps, row_tile = plan(num_cores)
        if num_cores > 1 and steps * row_tile >= rows:
            # Second core's row range would start past the data; drop it.
            num_cores = 1
            steps, row_tile = plan(1)

    needs_mask = num_cores * steps * row_tile > rows

    kernel = _make_kl_kernel(rows, steps, row_tile, acc_rows, needs_mask)

    in_spec = pl.BlockSpec((row_tile, _LANES), lambda c, i: (c * steps + i, 0))

    partials = pl.pallas_call(
        kernel,
        out_shape=jax.ShapeDtypeStruct((num_cores, 8, _LANES), jnp.float32),
        grid_spec=pltpu.PrefetchScalarGridSpec(
            num_scalar_prefetch=0,
            grid=(num_cores, steps),
            in_specs=[in_spec, in_spec],
            out_specs=pl.BlockSpec((1, 8, _LANES), lambda c, i: (c, 0, 0)),
            scratch_shapes=[pltpu.VMEM((acc_rows, _LANES), jnp.float32)],
        ),
        compiler_params=pltpu.CompilerParams(
            dimension_semantics=("parallel", "arbitrary"),
        ),
        cost_estimate=pl.CostEstimate(
            flops=6 * total,
            transcendentals=total,
            bytes_accessed=2 * total * itemsize + num_cores * 8 * _LANES * 4,
        ),
    )(mu2, lv2)

    # Each core writes one (8, 128) block of (-0.5 * partial sums); summing the
    # tiny partials array yields the scalar loss.
    return jnp.sum(partials)


if __name__ == "__main__":
    key = jax.random.PRNGKey(0)
    k_mu, k_lv = jax.random.split(key)

    # Small NCHW conv-style latent: (B=2, C=4, 16, 16)
    mu = jax.random.normal(k_mu, (2, 4, 16, 16), dtype=jnp.float32)
    logvar = jax.random.normal(k_lv, (2, 4, 16, 16), dtype=jnp.float32) * 0.1

    loss = kl_loss(mu, logvar)
    jax.block_until_ready(loss)

    # Reference check (plain JAX)
    ref = -0.5 * jnp.sum(1.0 + logvar - mu ** 2 - jnp.exp(logvar))
    assert jnp.allclose(loss, ref, rtol=1e-5, atol=1e-5), (loss, ref)

    print("KERNEL_OK")
</pallas_src>

<mosaic_0001>
module attributes {stable_mosaic.version = 11 : i64} {
  func.func @kernel(%arg0: i32, %arg1: i32, %arg2: memref<16x128xf32, #tpu.memory_space<vmem>>, %arg3: memref<16x128xf32, #tpu.memory_space<vmem>>, %arg4: memref<1x8x128xf32, #tpu.memory_space<vmem>>, %arg5: memref<16x128xf32, #tpu.memory_space<vmem>>) attributes {dimension_semantics = [#tpu.dimension_semantics<parallel>, #tpu.dimension_semantics<arbitrary>], iteration_bounds = array<i64: 1, 1>, scalar_prefetch = 0 : i64, scratch_operands = 1 : i64, tpu.core_type = #tpu.core_type<tc>, window_params = [{transform_indices = @transform_0, window_bounds = array<i64: 16, 128>}, {transform_indices = @transform_1, window_bounds = array<i64: 16, 128>}, {transform_indices = @transform_2, window_bounds = array<i64: 1, 8, 128>}]} {
    %c0_i32 = arith.constant 0 : i32
    %0 = arith.cmpi eq, %arg1, %c0_i32 : i32
    %1 = arith.extui %0 : i1 to i32
    %c0_i32_0 = arith.constant 0 : i32
    %2 = arith.cmpi ne, %1, %c0_i32_0 : i32
    scf.if %2 {
      %cst_10 = arith.constant 0.000000e+00 : f32
      %17 = vector.broadcast %cst_10 : f32 to vector<16x128xf32>
      %c0_11 = arith.constant 0 : index
      %c0_12 = arith.constant 0 : index
      %18 = vector.load %arg5[%c0_11, %c0_12] : memref<16x128xf32, #tpu.memory_space<vmem>>, vector<16x128xf32>
      tpu.vector_store %arg5[%c0_11, %c0_12], %17 {strides = array<i32>} : memref<16x128xf32, #tpu.memory_space<vmem>>, vector<16x128xf32>,
    } else {
    }
    %c0 = arith.constant 0 : index
    %c0_1 = arith.constant 0 : index
    %3 = vector.load %arg2[%c0, %c0_1] : memref<16x128xf32, #tpu.memory_space<vmem>>, vector<16x128xf32>
    %c0_2 = arith.constant 0 : index
    %c0_3 = arith.constant 0 : index
    %4 = vector.load %arg3[%c0_2, %c0_3] : memref<16x128xf32, #tpu.memory_space<vmem>>, vector<16x128xf32>
    %cst = arith.constant 1.000000e+00 : f32
    %5 = vector.broadcast %cst : f32 to vector<16x128xf32>
    %6 = arith.addf %5, %4 : vector<16x128xf32>
    %7 = arith.mulf %3, %3 : vector<16x128xf32>
    %8 = arith.subf %6, %7 : vector<16x128xf32>
    %9 = math.exp %4 : vector<16x128xf32>
    %10 = arith.subf %8, %9 : vector<16x128xf32>
    %c0_4 = arith.constant 0 : index
    %c0_5 = arith.constant 0 : index
    %11 = vector.load %arg5[%c0_4, %c0_5] : memref<16x128xf32, #tpu.memory_space<vmem>>, vector<16x128xf32>
    %12 = arith.addf %11, %10 : vector<16x128xf32>
    %c0_6 = arith.constant 0 : index
    %c0_7 = arith.constant 0 : index
    %13 = vector.load %arg5[%c0_6, %c0_7] : memref<16x128xf32, #tpu.memory_space<vmem>>, vector<16x128xf32>
    tpu.vector_store %arg5[%c0_6, %c0_7], %12 {strides = array<i32>} : memref<16x128xf32, #tpu.memory_space<vmem>>, vector<16x128xf32>,
    %c0_i32_8 = arith.constant 0 : i32
    %14 = arith.cmpi eq, %arg1, %c0_i32_8 : i32
    %15 = arith.extui %14 : i1 to i32
    %c0_i32_9 = arith.constant 0 : i32
    %16 = arith.cmpi ne, %15, %c0_i32_9 : i32
    scf.if %16 {
      %c0_10 = arith.constant 0 : index
      %c0_11 = arith.constant 0 : index
      %17 = vector.load %arg5[%c0_10, %c0_11] : memref<16x128xf32, #tpu.memory_space<vmem>>, vector<16x128xf32>
      %18 = vector.extract_strided_slice %17 {offsets = [0, 0], sizes = [8, 128], strides = [1, 1]} : vector<16x128xf32> to vector<8x128xf32>
      %19 = vector.extract_strided_slice %17 {offsets = [8, 0], sizes = [8, 128], strides = [1, 1]} : vector<16x128xf32> to vector<8x128xf32>
      %20 = arith.addf %18, %19 : vector<8x128xf32>
      %cst_12 = arith.constant -5.000000e-01 : f32
      %21 = vector.broadcast %cst_12 : f32 to vector<8x128xf32>
      %22 = arith.mulf %21, %20 : vector<8x128xf32>
      %23 = vector.shape_cast %22 : vector<8x128xf32> to vector<1x8x128xf32>
      %c0_13 = arith.constant 0 : index
      %c0_14 = arith.constant 0 : index
      %c0_15 = arith.constant 0 : index
      %24 = vector.load %arg4[%c0_13, %c0_14, %c0_15] : memref<1x8x128xf32, #tpu.memory_space<vmem>>, vector<1x8x128xf32>
      tpu.vector_store %arg4[%c0_13, %c0_14, %c0_15], %23 {strides = array<i32>} : memref<1x8x128xf32, #tpu.memory_space<vmem>>, vector<1x8x128xf32>,
    } else {
    }
    return
  }
  func.func @transform_0(%arg0: i32, %arg1: i32) -> (i32, i32) {
    %c1_i32 = arith.constant 1 : i32
    %0 = arith.muli %arg0, %c1_i32 : i32
    %1 = arith.addi %0, %arg1 : i32
    %c0_i32 = arith.constant 0 : i32
    %c0_i32_0 = arith.constant 0 : i32
    return %1, %c0_i32 : i32, i32
  }
  func.func @transform_1(%arg0: i32, %arg1: i32) -> (i32, i32) {
    %c1_i32 = arith.constant 1 : i32
    %0 = arith.muli %arg0, %c1_i32 : i32
    %1 = arith.addi %0, %arg1 : i32
    %c0_i32 = arith.constant 0 : i32
    %c0_i32_0 = arith.constant 0 : i32
    return %1, %c0_i32 : i32, i32
  }
  func.func @transform_2(%arg0: i32, %arg1: i32) -> (i32, i32, i32) {
    %c0_i32 = arith.constant 0 : i32
    %c0_i32_0 = arith.constant 0 : i32
    %c0_i32_1 = arith.constant 0 : i32
    return %arg0, %c0_i32, %c0_i32_0 : i32, i32, i32
  }
}

</mosaic_0001>

<llo_original>
// kernel: tpu_custom_call.1
$region0: #{tpu_custom_call.1}
  #allocation0 [shape = 'u32[]', space=smem, size = 0x4, offset = 0x4, fixed_abs, tag = 'smem constant byte address 0x4 - core index']
  #allocation1 [shape = 'u32[72,128]{1,0:T(1,128)}', space=vmem, size = 0x9000, scoped, tag = 'internal scratch']
  #allocation2 [shape = 'f32[16,128]{1,0:T(8,128)}', space=vmem, size = 0x2000, scoped, tag = 'scratch operand']
  %s0 = inlined_call_operand.hbm [shape: f32[16,128], index: 0, kind: input, shape index: {}]
  %s1 = inlined_call_operand.hbm [shape: f32[16,128], index: 1, kind: input, shape index: {}]
  %s2 = inlined_call_operand.hbm [shape: f32[1,8,128], index: 2, kind: output, shape index: {}]
  %s3 = sld [smem:[#allocation0]]
  $region34: #{tpu_custom_call.1} parent=0
    _
  %s5 = ssub.s32 1, %s3
  %s6 = scalar_select 0, %s5, %s3
  $region1: #{tpu_custom_call.1} parent=0
    #allocation3 [shape = 'u8[8192]{0}', space=vmem, size = 0x2000, scoped, tag = 'input window, operand 0, single buffered']
    #allocation4 [shape = 's32[1]{0}', space=sflag, size = 0x4, scoped, tag = 'scoped memory for tpu_custom_call.1']
    #allocation5 [shape = 's32[1]{0}', space=sflag, size = 0x4, scoped, tag = 'scoped memory for tpu_custom_call.1']
    #allocation6 [shape = 'u8[8192]{0}', space=vmem, size = 0x2000, scoped, tag = 'input window, operand 1, single buffered']
    #allocation7 [shape = 's32[1]{0}', space=sflag, size = 0x4, scoped, tag = 'scoped memory for tpu_custom_call.1']
    #allocation8 [shape = 'u8[4096]{0}', space=vmem, size = 0x1000, scoped, tag = 'output window, operand 0, single buffered']
    %7 = vsyncpa [#allocation4], 0
    %8 = vsyncpa [#allocation7], 0
    %9 = vsyncpa [#allocation5], 0
    // Predicated region
    $region2: #{tpu_custom_call.1} parent=1 // pred_check
      _
    $region3: #{tpu_custom_call.1} parent=1 // pred_check_branch
      %11 = sbr.rel (0) target = $region5
    $region4: #{tpu_custom_call.1} parent=1 // pred_region
      %s12 = sadd.s32 0, 0
      %s13 = smul.u32 2, %s12
      %15 = vsyncadd [#allocation4], 0
      %s16 = smul.addr %s13, 8
      %s17 = scalar_lea.hbm %s0, %s16
      %s18 = sshll.u32 %s17, 4
      %s19 = int_to_ptr.hbm [resolvable:$true] %s18
      %s20 = sshll.u32 [#allocation3], 4
      %s21 = int_to_ptr.vmem [resolvable:$true] %s20
      %26 = dma.hbm_to_vmem [thread:$0]  %s19, 256, %s21, [#allocation4], 128, 128, 8
    $region5: #{tpu_custom_call.1} parent=1 // pred_fallthru
      _
    // Predicated region
    $region6: #{tpu_custom_call.1} parent=1 // pred_check
      _
    $region7: #{tpu_custom_call.1} parent=1 // pred_check_branch
      %28 = sbr.rel (0) target = $region9
    $region8: #{tpu_custom_call.1} parent=1 // pred_region
      %s29 = sadd.s32 0, 0
      %s30 = smul.u32 2, %s29
      %32 = vsyncadd [#allocation7], 0
      %s33 = smul.addr %s30, 8
      %s34 = scalar_lea.hbm %s1, %s33
      %s35 = sshll.u32 %s34, 4
      %s36 = int_to_ptr.hbm [resolvable:$true] %s35
      %s37 = sshll.u32 [#allocation6], 4
      %s38 = int_to_ptr.vmem [resolvable:$true] %s37
      %43 = dma.hbm_to_vmem [thread:$0]  %s36, 256, %s38, [#allocation7], 128, 128, 8
    $region9: #{tpu_custom_call.1} parent=1 // pred_fallthru
      _
    // Predicated region
    $region10: #{tpu_custom_call.1} parent=1 // pred_check
      _
    $region11: #{tpu_custom_call.1} parent=1 // pred_check_branch
      %45 = sbr.rel (0) target = $region13
    $region12: #{tpu_custom_call.1} parent=1 // pred_region
      %47 = dma.done [#allocation4], 256
    $region13: #{tpu_custom_call.1} parent=1 // pred_fallthru
      _
    // Predicated region
    $region14: #{tpu_custom_call.1} parent=1 // pred_check
      _
    $region15: #{tpu_custom_call.1} parent=1 // pred_check_branch
      %49 = sbr.rel (0) target = $region17
    $region16: #{tpu_custom_call.1} parent=1 // pred_region
      %51 = dma.done [#allocation7], 256
    $region17: #{tpu_custom_call.1} parent=1 // pred_fallthru
      _
    %s52 = sadd.s32 0, 0
    %s53 = smul.u32 2, %s52
    %s54 = sadd.s32 0, 0
    %s55 = smul.u32 2, %s54
    %p56 = scmp.eq.s32.totalorder 0, 0
    // Predicated region
    $region18: #{tpu_custom_call.1} parent=1 // pred_check
      %p57 = pneg %p56
    $region19: #{tpu_custom_call.1} parent=1 // pred_check_branch
      %59 = sbr.rel (%p57) target = $region21
    $region20: #{tpu_custom_call.1} parent=1 // pred_region
      %60 = vst [vmem:[#allocation2] sm:$0xff] 0.0
      %61 = vst [vmem:[#allocation2 + $0x8] sm:$0xff] 0.0
    $region21: #{tpu_custom_call.1} parent=1 // pred_fallthru
      _
    %v62 = vld [vmem:[#allocation3] sm:$0xff]
    %v63 = vld [vmem:[#allocation3 + $0x8] sm:$0xff]
    %v64 = vld [vmem:[#allocation6] sm:$0xff]
    %v65 = vld [vmem:[#allocation6 + $0x8] sm:$0xff]
    %v66 = vadd.f32 %v64, 1.0
    %v67 = vadd.f32 %v65, 1.0
    %v68 = vmul.f32 %v62, %v62
    %v69 = vmul.f32 %v63, %v63
    %v70 = vsub.f32 %v66, %v68
    %v71 = vsub.f32 %v67, %v69
    %v72 = vmul.f32 %v64, 1.442695
    %v73 = vpow.pop %v72
    %v74 = vmul.f32 %v65, 1.442695
    %v75 = vpow.pop %v74
    %v76 = vsub.f32 %v70, %v73
    %v77 = vsub.f32 %v71, %v75
    %v78 = vld [vmem:[#allocation2] sm:$0xff]
    %v79 = vld [vmem:[#allocation2 + $0x8] sm:$0xff]
    %v80 = vadd.f32 %v78, %v76
    %v81 = vadd.f32 %v79, %v77
    %82 = vst [vmem:[#allocation2] sm:$0xff] %v80
    %83 = vst [vmem:[#allocation2 + $0x8] sm:$0xff] %v81
    // Predicated region
    $region22: #{tpu_custom_call.1} parent=1 // pred_check
      %p84 = pneg %p56
    $region23: #{tpu_custom_call.1} parent=1 // pred_check_branch
      %86 = sbr.rel (%p84) target = $region25
    $region24: #{tpu_custom_call.1} parent=1 // pred_region
      %v87 = vld [vmem:[#allocation2] sm:$0xff]
      %v88 = vld [vmem:[#allocation2 + $0x8] sm:$0xff]
      %v89 = vadd.f32 %v87, %v88
      %v90 = vmul.f32 %v89, -0.5
      %91 = vst [vmem:[#allocation8] sm:$0xff] %v90
    $region25: #{tpu_custom_call.1} parent=1 // pred_fallthru
      _
    // Predicated region
    $region26: #{tpu_custom_call.1} parent=1 // pred_check
      _
    $region27: #{tpu_custom_call.1} parent=1 // pred_check_branch
      %93 = sbr.rel (0) target = $region29
    $region28: #{tpu_custom_call.1} parent=1 // pred_region
      %95 = vsyncadd [#allocation5], 0
      %s97 = sshll.u32 [#allocation8], 4
      %s98 = int_to_ptr.vmem [resolvable:$true] %s97
      %s99 = sshll.u32 %s2, 4
      %s100 = int_to_ptr.hbm [resolvable:$true] %s99
      %102 = dma.vmem_to_hbm [thread:$0]  %s98, 128, %s100, [#allocation5]
    $region29: #{tpu_custom_call.1} parent=1 // pred_fallthru
      _
    // Predicated region
    $region30: #{tpu_custom_call.1} parent=1 // pred_check
      _
    $region31: #{tpu_custom_call.1} parent=1 // pred_check_branch
      %104 = sbr.rel (0) target = $region33
    $region32: #{tpu_custom_call.1} parent=1 // pred_region
      %106 = dma.done [#allocation5], 128
    $region33: #{tpu_custom_call.1} parent=1 // pred_fallthru
      _
    %107 = vsyncpa [#allocation4], 1
    %108 = vsyncpa [#allocation7], 1
    %109 = vsyncpa [#allocation5], 1

</llo_original>
